<compile_context>
chip_gen: v6e
topology: v6e:2x2x1
jax: 0.10.0
libtpu: 0.0.40
codegen_flags: <defaults>
</compile_context>

<pallas_src>
import functools

import jax
import jax.numpy as jnp
from jax.experimental import pallas as pl
from jax.experimental.pallas import tpu as pltpu

BN_EPS = 1e-5
LANES = 128          # every feature dimension padded to the 128-lane vreg width
ROWS_PER_VEC = 8     # each parameter vector pre-broadcast to 8 sublanes

# Plane indices inside the packed parameter slab (bf16 [6, 128, 128]).
_HI_PLANE, _LO_PLANE = 4, 5
# Vector slots inside planes 4 (hi) and 5 (lo); row offset = slot * ROWS_PER_VEC.
_G1, _BE1, _B2, _G2, _BE2, _B3, _G3, _BE3, _B4 = range(9)


def mainmodel_kernel(x_ref, w_ref, o_ref):
    # x_ref : [B, 128]        bf16 (zero-padded; lane `in_size` is constant 1.0)
    # w_ref : [6, 128, 128]   bf16 (see slab layout at top of file)
    # o_ref : [B, 128]        f32  (lane-dense padded output block)
    B = x_ref.shape[0]
    hi_ref = w_ref.at[_HI_PLANE]
    lo_ref = w_ref.at[_LO_PLANE]

    def vec(slot):
        # Pre-broadcast rows -> plain lane-dense loads that land in spare vld
        # slots; hi + lo reconstructs the f32-exact parameter values.
        r0 = slot * ROWS_PER_VEC
        hi = hi_ref[r0:r0 + ROWS_PER_VEC, :].astype(jnp.float32)
        lo = lo_ref[r0:r0 + ROWS_PER_VEC, :].astype(jnp.float32)
        return (hi + lo)[:B]                       # identity slice when B == 8

    def bn(h, g_slot, be_slot):
        # Training-mode BatchNorm1d (biased batch variance), fused one-pass.
        g, be = vec(g_slot), vec(be_slot)
        m = jnp.mean(h, axis=0, keepdims=True)
        m2 = jnp.mean(h * h, axis=0, keepdims=True)
        var = jnp.maximum(m2 - m * m, 0.0)         # guard against cancellation
        s = g * jax.lax.rsqrt(var + BN_EPS)        # rsqrt -> otherwise-idle EUP
        t = be - m * s
        return h * s + t

    # Layer 1: b1 folded into W1 via the constant-1 lane of x_pad.
    h = jnp.dot(x_ref[...], w_ref[0], preferred_element_type=jnp.float32)
    h = bn(jnp.maximum(h, 0.0), _G1, _BE1).astype(jnp.bfloat16)

    h = jnp.dot(h, w_ref[1], preferred_element_type=jnp.float32) + vec(_B2)
    h = bn(jnp.maximum(h, 0.0), _G2, _BE2).astype(jnp.bfloat16)

    h = jnp.dot(h, w_ref[2], preferred_element_type=jnp.float32) + vec(_B3)
    h = bn(jnp.maximum(h, 0.0), _G3, _BE3).astype(jnp.bfloat16)

    logits = jnp.dot(h, w_ref[3], preferred_element_type=jnp.float32) + vec(_B4)
    # Lane-dense store of the full padded block; padded lanes hold sigmoid(0)
    # = 0.5 and are sliced away in the wrapper.
    o_ref[...] = jax.nn.sigmoid(logits).astype(o_ref.dtype)


def pack_params(params):
    """Pack the 14 PyTorch-shaped parameters into one bf16 [6,128,128] slab."""
    (w1, b1, g1, be1, w2, b2, g2, be2, w3, b3, g3, be3, w4, b4) = params
    in_size = w1.shape[0]
    assert in_size < LANES, "need a spare lane for the folded b1"
    assert max(w.shape[1] for w in (w1, w2, w3, w4)) <= LANES

    def pad_w(w, bias=None):
        fi, fo = w.shape
        wp = jnp.pad(w, ((0, LANES - fi), (0, LANES - fo)))
        if bias is not None:                 # fold bias into row `fi`
            wp = wp.at[fi, :fo].set(bias[0])
        return wp.astype(jnp.bfloat16)

    def vec_planes(vecs):
        his, los = [], []
        for v in vecs:                       # v: (1, fo) f32
            hi = v.astype(jnp.bfloat16)
            lo = (v - hi.astype(jnp.float32)).astype(jnp.bfloat16)
            for dst, part in ((his, hi), (los, lo)):
                p = jnp.pad(part, ((0, 0), (0, LANES - part.shape[1])))
                dst.append(jnp.broadcast_to(p, (ROWS_PER_VEC, LANES)))

        def plane(rows):
            stacked = jnp.concatenate(rows, axis=0)
            return jnp.pad(stacked, ((0, LANES - stacked.shape[0]), (0, 0)))

        return plane(his), plane(los)

    hi_plane, lo_plane = vec_planes([g1, be1, b2, g2, be2, b3, g3, be3, b4])
    return jnp.stack([pad_w(w1, b1), pad_w(w2), pad_w(w3), pad_w(w4),
                      hi_plane, lo_plane])


@functools.partial(jax.jit, static_argnames=("out_size",))
def mainmodel_forward(x, w_slab, *, out_size):
    B, in_size = x.shape
    assert B <= ROWS_PER_VEC, "pre-broadcast vec rows assume B <= 8 (see note)"
    assert in_size < LANES

    # Pad features to 128 lanes; lane `in_size` is the constant-1 lane that
    # folds b1 into W1.
    x_pad = jnp.zeros((B, LANES), jnp.float32)
    x_pad = x_pad.at[:, :in_size].set(x).at[:, in_size].set(1.0)
    x_pad = x_pad.astype(jnp.bfloat16)

    full = lambda shape: pl.BlockSpec(shape, lambda: (0,) * len(shape))
    out = pl.pallas_call(
        mainmodel_kernel,
        out_shape=jax.ShapeDtypeStruct((B, LANES), jnp.float32),
        grid=(),
        in_specs=[full(x_pad.shape), full(w_slab.shape)],
        out_specs=full((B, LANES)),
        # Small explicit VMEM request (kernel uses < 1 MiB); well under the
        # scoped budget on v5e/v6e and v7x's 64 MiB physical VMEM.
        compiler_params=pltpu.CompilerParams(vmem_limit_bytes=4 * 1024 * 1024),
    )(x_pad, w_slab)
    # Lane-dense kernel store; narrow out_size slice is free wrapper plumbing.
    return out[:, :out_size]


def init_params(key, input_size, output_size, hidden_size):
    """Deterministic synthetic parameters matching the PyTorch module shapes."""
    h, h2 = hidden_size, hidden_size * 2
    dims = [(input_size, h), (h, h2), (h2, h2), (h2, output_size)]
    keys = jax.random.split(key, 2 * len(dims))
    params = []
    for i, (fan_in, fan_out) in enumerate(dims):
        scale = 1.0 / jnp.sqrt(fan_in)
        w = jax.random.uniform(
            keys[2 * i], (fan_in, fan_out), jnp.float32, -scale, scale
        )
        b = jax.random.uniform(
            keys[2 * i + 1], (1, fan_out), jnp.float32, -scale, scale
        )
        params.append((w, b))
        if i < 3:  # BatchNorm1d after the first three Linear+ReLU blocks
            gamma = jnp.ones((1, fan_out), jnp.float32)
            beta = jnp.zeros((1, fan_out), jnp.float32)
            params.append((gamma, beta))
    flat = []
    for p in params:
        flat.extend(p)
    # (w1,b1,g1,be1, w2,b2,g2,be2, w3,b3,g3,be3, w4,b4)
    return tuple(flat)


def reference_forward(x, params):
    """Pure-JAX reference: f32 params, bf16 MXU inputs / f32 accumulation."""
    (w1, b1, g1, be1, w2, b2, g2, be2, w3, b3, g3, be3, w4, b4) = params

    def bn(h, g, be):
        mean = jnp.mean(h, axis=0, keepdims=True)
        var = jnp.mean((h - mean) ** 2, axis=0, keepdims=True)
        return (h - mean) / jnp.sqrt(var + BN_EPS) * g + be

    def lin(h, w, b):
        return jnp.dot(h.astype(jnp.bfloat16), w.astype(jnp.bfloat16),
                       preferred_element_type=jnp.float32) + b

    h = bn(jnp.maximum(lin(x, w1, b1), 0.0), g1, be1)
    h = bn(jnp.maximum(lin(h, w2, b2), 0.0), g2, be2)
    h = bn(jnp.maximum(lin(h, w3, b3), 0.0), g3, be3)
    return jax.nn.sigmoid(lin(h, w4, b4))


if __name__ == "__main__":
    batch = 8
    input_size = 32
    hidden_size = 32
    output_size = 8

    key = jax.random.PRNGKey(0)
    kx, kp = jax.random.split(key)
    x = jax.random.normal(kx, (batch, input_size), jnp.float32)
    params = init_params(kp, input_size, output_size, hidden_size)

    w_slab = pack_params(params)
    out = mainmodel_forward(x, w_slab, out_size=output_size)
    out = jax.block_until_ready(out)

    ref = reference_forward(x, params)
    assert out.shape == (batch, output_size)
    assert jnp.allclose(out, ref, atol=1e-3, rtol=1e-3), (
        "Pallas output mismatch vs JAX reference"
    )
    print("KERNEL_OK")
</pallas_src>

<mosaic_0001>
module attributes {stable_mosaic.version = 11 : i64} {
  func.func @mainmodel_kernel(%arg0: memref<8x128xbf16, #tpu.memory_space<vmem>>, %arg1: memref<6x128x128xbf16, #tpu.memory_space<vmem>>, %arg2: memref<8x128xf32, #tpu.memory_space<vmem>>) attributes {dimension_semantics = [], scalar_prefetch = 0 : i64, scratch_operands = 0 : i64, tpu.core_type = #tpu.core_type<tc>} {
    %c0 = arith.constant 0 : index
    %c0_0 = arith.constant 0 : index
    %0 = vector.load %arg0[%c0, %c0_0] : memref<8x128xbf16, #tpu.memory_space<vmem>>, vector<8x128xbf16>
    %c0_1 = arith.constant 0 : index
    %c0_2 = arith.constant 0 : index
    %c0_3 = arith.constant 0 : index
    %1 = vector.load %arg1[%c0_1, %c0_2, %c0_3] : memref<6x128x128xbf16, #tpu.memory_space<vmem>>, vector<1x128x128xbf16>
    %2 = vector.shape_cast %1 : vector<1x128x128xbf16> to vector<128x128xbf16>
    %cst = arith.constant dense<0.000000e+00> : vector<8x128xf32>
    %3 = tpu.matmul %0, %2, %cst {dimension_numbers = #tpu.dot_dimension_numbers<[1], [0], [0], [1], [0, 0, 1, 1], [], []>} : vector<8x128xbf16>, vector<128x128xbf16>, vector<8x128xf32> -> vector<8x128xf32>
    %cst_4 = arith.constant 0.000000e+00 : f32
    %4 = vector.broadcast %cst_4 : f32 to vector<8x128xf32>
    %5 = arith.maximumf %3, %4 : vector<8x128xf32>
    %c4_i32 = arith.constant 4 : i32
    %c0_i32 = arith.constant 0 : i32
    %c0_i32_5 = arith.constant 0 : i32
    %6 = tpu.memref_slice %arg1[%c4_i32, %c0_i32, %c0_i32_5] : memref<6x128x128xbf16, #tpu.memory_space<vmem>> -> memref<1x128x128xbf16, #tpu.memory_space<vmem>>
    %7 = tpu.memref_squeeze %6 : memref<1x128x128xbf16, #tpu.memory_space<vmem>> -> memref<128x128xbf16, #tpu.memory_space<vmem>>
    %c0_6 = arith.constant 0 : index
    %c0_7 = arith.constant 0 : index
    %8 = vector.load %7[%c0_6, %c0_7] : memref<128x128xbf16, #tpu.memory_space<vmem>>, vector<8x128xbf16>
    %9 = arith.extf %8 : vector<8x128xbf16> to vector<8x128xf32>
    %c5_i32 = arith.constant 5 : i32
    %c0_i32_8 = arith.constant 0 : i32
    %c0_i32_9 = arith.constant 0 : i32
    %10 = tpu.memref_slice %arg1[%c5_i32, %c0_i32_8, %c0_i32_9] : memref<6x128x128xbf16, #tpu.memory_space<vmem>> -> memref<1x128x128xbf16, #tpu.memory_space<vmem>>
    %11 = tpu.memref_squeeze %10 : memref<1x128x128xbf16, #tpu.memory_space<vmem>> -> memref<128x128xbf16, #tpu.memory_space<vmem>>
    %c0_10 = arith.constant 0 : index
    %c0_11 = arith.constant 0 : index
    %12 = vector.load %11[%c0_10, %c0_11] : memref<128x128xbf16, #tpu.memory_space<vmem>>, vector<8x128xbf16>
    %13 = arith.extf %12 : vector<8x128xbf16> to vector<8x128xf32>
    %14 = arith.addf %9, %13 : vector<8x128xf32>
    %c4_i32_12 = arith.constant 4 : i32
    %c0_i32_13 = arith.constant 0 : i32
    %c0_i32_14 = arith.constant 0 : i32
    %15 = tpu.memref_slice %arg1[%c4_i32_12, %c0_i32_13, %c0_i32_14] : memref<6x128x128xbf16, #tpu.memory_space<vmem>> -> memref<1x128x128xbf16, #tpu.memory_space<vmem>>
    %16 = tpu.memref_squeeze %15 : memref<1x128x128xbf16, #tpu.memory_space<vmem>> -> memref<128x128xbf16, #tpu.memory_space<vmem>>
    %c8 = arith.constant 8 : index
    %c0_15 = arith.constant 0 : index
    %17 = vector.load %16[%c8, %c0_15] : memref<128x128xbf16, #tpu.memory_space<vmem>>, vector<8x128xbf16>
    %18 = arith.extf %17 : vector<8x128xbf16> to vector<8x128xf32>
    %c5_i32_16 = arith.constant 5 : i32
    %c0_i32_17 = arith.constant 0 : i32
    %c0_i32_18 = arith.constant 0 : i32
    %19 = tpu.memref_slice %arg1[%c5_i32_16, %c0_i32_17, %c0_i32_18] : memref<6x128x128xbf16, #tpu.memory_space<vmem>> -> memref<1x128x128xbf16, #tpu.memory_space<vmem>>
    %20 = tpu.memref_squeeze %19 : memref<1x128x128xbf16, #tpu.memory_space<vmem>> -> memref<128x128xbf16, #tpu.memory_space<vmem>>
    %c8_19 = arith.constant 8 : index
    %c0_20 = arith.constant 0 : index
    %21 = vector.load %20[%c8_19, %c0_20] : memref<128x128xbf16, #tpu.memory_space<vmem>>, vector<8x128xbf16>
    %22 = arith.extf %21 : vector<8x128xbf16> to vector<8x128xf32>
    %23 = arith.addf %18, %22 : vector<8x128xf32>
    %cst_21 = arith.constant dense<0.000000e+00> : vector<128xf32>
    %24 = vector.multi_reduction <add>, %5, %cst_21 [0] : vector<8x128xf32> to vector<128xf32>
    %25 = vector.shape_cast %24 : vector<128xf32> to vector<1x128xf32>
    %cst_22 = arith.constant 8.000000e+00 : f32
    %26 = vector.broadcast %cst_22 : f32 to vector<1x128xf32>
    %27 = arith.divf %25, %26 : vector<1x128xf32>
    %28 = arith.mulf %5, %5 : vector<8x128xf32>
    %cst_23 = arith.constant dense<0.000000e+00> : vector<128xf32>
    %29 = vector.multi_reduction <add>, %28, %cst_23 [0] : vector<8x128xf32> to vector<128xf32>
    %30 = vector.shape_cast %29 : vector<128xf32> to vector<1x128xf32>
    %cst_24 = arith.constant 8.000000e+00 : f32
    %31 = vector.broadcast %cst_24 : f32 to vector<1x128xf32>
    %32 = arith.divf %30, %31 : vector<1x128xf32>
    %33 = arith.mulf %27, %27 : vector<1x128xf32>
    %34 = arith.subf %32, %33 : vector<1x128xf32>
    %cst_25 = arith.constant 0.000000e+00 : f32
    %35 = vector.broadcast %cst_25 : f32 to vector<1x128xf32>
    %36 = arith.maximumf %34, %35 : vector<1x128xf32>
    %cst_26 = arith.constant 9.99999974E-6 : f32
    %37 = vector.broadcast %cst_26 : f32 to vector<1x128xf32>
    %38 = arith.addf %36, %37 : vector<1x128xf32>
    %39 = math.rsqrt %38 : vector<1x128xf32>
    %40 = vector.broadcast %39 : vector<1x128xf32> to vector<8x128xf32>
    %41 = arith.mulf %14, %40 : vector<8x128xf32>
    %42 = vector.broadcast %27 : vector<1x128xf32> to vector<8x128xf32>
    %43 = arith.mulf %42, %41 : vector<8x128xf32>
    %44 = arith.subf %23, %43 : vector<8x128xf32>
    %45 = arith.mulf %5, %41 : vector<8x128xf32>
    %46 = arith.addf %45, %44 : vector<8x128xf32>
    %47 = arith.truncf %46 : vector<8x128xf32> to vector<8x128xbf16>
    %c1 = arith.constant 1 : index
    %c0_27 = arith.constant 0 : index
    %c0_28 = arith.constant 0 : index
    %48 = vector.load %arg1[%c1, %c0_27, %c0_28] : memref<6x128x128xbf16, #tpu.memory_space<vmem>>, vector<1x128x128xbf16>
    %49 = vector.shape_cast %48 : vector<1x128x128xbf16> to vector<128x128xbf16>
    %cst_29 = arith.constant dense<0.000000e+00> : vector<8x128xf32>
    %50 = tpu.matmul %47, %49, %cst_29 {dimension_numbers = #tpu.dot_dimension_numbers<[1], [0], [0], [1], [0, 0, 1, 1], [], []>} : vector<8x128xbf16>, vector<128x128xbf16>, vector<8x128xf32> -> vector<8x128xf32>
    %c4_i32_30 = arith.constant 4 : i32
    %c0_i32_31 = arith.constant 0 : i32
    %c0_i32_32 = arith.constant 0 : i32
    %51 = tpu.memref_slice %arg1[%c4_i32_30, %c0_i32_31, %c0_i32_32] : memref<6x128x128xbf16, #tpu.memory_space<vmem>> -> memref<1x128x128xbf16, #tpu.memory_space<vmem>>
    %52 = tpu.memref_squeeze %51 : memref<1x128x128xbf16, #tpu.memory_space<vmem>> -> memref<128x128xbf16, #tpu.memory_space<vmem>>
    %c16 = arith.constant 16 : index
    %c0_33 = arith.constant 0 : index
    %53 = vector.load %52[%c16, %c0_33] : memref<128x128xbf16, #tpu.memory_space<vmem>>, vector<8x128xbf16>
    %54 = arith.extf %53 : vector<8x128xbf16> to vector<8x128xf32>
    %c5_i32_34 = arith.constant 5 : i32
    %c0_i32_35 = arith.constant 0 : i32
    %c0_i32_36 = arith.constant 0 : i32
    %55 = tpu.memref_slice %arg1[%c5_i32_34, %c0_i32_35, %c0_i32_36] : memref<6x128x128xbf16, #tpu.memory_space<vmem>> -> memref<1x128x128xbf16, #tpu.memory_space<vmem>>
    %56 = tpu.memref_squeeze %55 : memref<1x128x128xbf16, #tpu.memory_space<vmem>> -> memref<128x128xbf16, #tpu.memory_space<vmem>>
    %c16_37 = arith.constant 16 : index
    %c0_38 = arith.constant 0 : index
    %57 = vector.load %56[%c16_37, %c0_38] : memref<128x128xbf16, #tpu.memory_space<vmem>>, vector<8x128xbf16>
    %58 = arith.extf %57 : vector<8x128xbf16> to vector<8x128xf32>
    %59 = arith.addf %54, %58 : vector<8x128xf32>
    %60 = arith.addf %50, %59 : vector<8x128xf32>
    %cst_39 = arith.constant 0.000000e+00 : f32
    %61 = vector.broadcast %cst_39 : f32 to vector<8x128xf32>
    %62 = arith.maximumf %60, %61 : vector<8x128xf32>
    %c4_i32_40 = arith.constant 4 : i32
    %c0_i32_41 = arith.constant 0 : i32
    %c0_i32_42 = arith.constant 0 : i32
    %63 = tpu.memref_slice %arg1[%c4_i32_40, %c0_i32_41, %c0_i32_42] : memref<6x128x128xbf16, #tpu.memory_space<vmem>> -> memref<1x128x128xbf16, #tpu.memory_space<vmem>>
    %64 = tpu.memref_squeeze %63 : memref<1x128x128xbf16, #tpu.memory_space<vmem>> -> memref<128x128xbf16, #tpu.memory_space<vmem>>
    %c24 = arith.constant 24 : index
    %c0_43 = arith.constant 0 : index
    %65 = vector.load %64[%c24, %c0_43] : memref<128x128xbf16, #tpu.memory_space<vmem>>, vector<8x128xbf16>
    %66 = arith.extf %65 : vector<8x128xbf16> to vector<8x128xf32>
    %c5_i32_44 = arith.constant 5 : i32
    %c0_i32_45 = arith.constant 0 : i32
    %c0_i32_46 = arith.constant 0 : i32
    %67 = tpu.memref_slice %arg1[%c5_i32_44, %c0_i32_45, %c0_i32_46] : memref<6x128x128xbf16, #tpu.memory_space<vmem>> -> memref<1x128x128xbf16, #tpu.memory_space<vmem>>
    %68 = tpu.memref_squeeze %67 : memref<1x128x128xbf16, #tpu.memory_space<vmem>> -> memref<128x128xbf16, #tpu.memory_space<vmem>>
    %c24_47 = arith.constant 24 : index
    %c0_48 = arith.constant 0 : index
    %69 = vector.load %68[%c24_47, %c0_48] : memref<128x128xbf16, #tpu.memory_space<vmem>>, vector<8x128xbf16>
    %70 = arith.extf %69 : vector<8x128xbf16> to vector<8x128xf32>
    %71 = arith.addf %66, %70 : vector<8x128xf32>
    %c4_i32_49 = arith.constant 4 : i32
    %c0_i32_50 = arith.constant 0 : i32
    %c0_i32_51 = arith.constant 0 : i32
    %72 = tpu.memref_slice %arg1[%c4_i32_49, %c0_i32_50, %c0_i32_51] : memref<6x128x128xbf16, #tpu.memory_space<vmem>> -> memref<1x128x128xbf16, #tpu.memory_space<vmem>>
    %73 = tpu.memref_squeeze %72 : memref<1x128x128xbf16, #tpu.memory_space<vmem>> -> memref<128x128xbf16, #tpu.memory_space<vmem>>
    %c32 = arith.constant 32 : index
    %c0_52 = arith.constant 0 : index
    %74 = vector.load %73[%c32, %c0_52] : memref<128x128xbf16, #tpu.memory_space<vmem>>, vector<8x128xbf16>
    %75 = arith.extf %74 : vector<8x128xbf16> to vector<8x128xf32>
    %c5_i32_53 = arith.constant 5 : i32
    %c0_i32_54 = arith.constant 0 : i32
    %c0_i32_55 = arith.constant 0 : i32
    %76 = tpu.memref_slice %arg1[%c5_i32_53, %c0_i32_54, %c0_i32_55] : memref<6x128x128xbf16, #tpu.memory_space<vmem>> -> memref<1x128x128xbf16, #tpu.memory_space<vmem>>
    %77 = tpu.memref_squeeze %76 : memref<1x128x128xbf16, #tpu.memory_space<vmem>> -> memref<128x128xbf16, #tpu.memory_space<vmem>>
    %c32_56 = arith.constant 32 : index
    %c0_57 = arith.constant 0 : index
    %78 = vector.load %77[%c32_56, %c0_57] : memref<128x128xbf16, #tpu.memory_space<vmem>>, vector<8x128xbf16>
    %79 = arith.extf %78 : vector<8x128xbf16> to vector<8x128xf32>
    %80 = arith.addf %75, %79 : vector<8x128xf32>
    %cst_58 = arith.constant dense<0.000000e+00> : vector<128xf32>
    %81 = vector.multi_reduction <add>, %62, %cst_58 [0] : vector<8x128xf32> to vector<128xf32>
    %82 = vector.shape_cast %81 : vector<128xf32> to vector<1x128xf32>
    %cst_59 = arith.constant 8.000000e+00 : f32
    %83 = vector.broadcast %cst_59 : f32 to vector<1x128xf32>
    %84 = arith.divf %82, %83 : vector<1x128xf32>
    %85 = arith.mulf %62, %62 : vector<8x128xf32>
    %cst_60 = arith.constant dense<0.000000e+00> : vector<128xf32>
    %86 = vector.multi_reduction <add>, %85, %cst_60 [0] : vector<8x128xf32> to vector<128xf32>
    %87 = vector.shape_cast %86 : vector<128xf32> to vector<1x128xf32>
    %cst_61 = arith.constant 8.000000e+00 : f32
    %88 = vector.broadcast %cst_61 : f32 to vector<1x128xf32>
    %89 = arith.divf %87, %88 : vector<1x128xf32>
    %90 = arith.mulf %84, %84 : vector<1x128xf32>
    %91 = arith.subf %89, %90 : vector<1x128xf32>
    %cst_62 = arith.constant 0.000000e+00 : f32
    %92 = vector.broadcast %cst_62 : f32 to vector<1x128xf32>
    %93 = arith.maximumf %91, %92 : vector<1x128xf32>
    %cst_63 = arith.constant 9.99999974E-6 : f32
    %94 = vector.broadcast %cst_63 : f32 to vector<1x128xf32>
    %95 = arith.addf %93, %94 : vector<1x128xf32>
    %96 = math.rsqrt %95 : vector<1x128xf32>
    %97 = vector.broadcast %96 : vector<1x128xf32> to vector<8x128xf32>
    %98 = arith.mulf %71, %97 : vector<8x128xf32>
    %99 = vector.broadcast %84 : vector<1x128xf32> to vector<8x128xf32>
    %100 = arith.mulf %99, %98 : vector<8x128xf32>
    %101 = arith.subf %80, %100 : vector<8x128xf32>
    %102 = arith.mulf %62, %98 : vector<8x128xf32>
    %103 = arith.addf %102, %101 : vector<8x128xf32>
    %104 = arith.truncf %103 : vector<8x128xf32> to vector<8x128xbf16>
    %c2 = arith.constant 2 : index
    %c0_64 = arith.constant 0 : index
    %c0_65 = arith.constant 0 : index
    %105 = vector.load %arg1[%c2, %c0_64, %c0_65] : memref<6x128x128xbf16, #tpu.memory_space<vmem>>, vector<1x128x128xbf16>
    %106 = vector.shape_cast %105 : vector<1x128x128xbf16> to vector<128x128xbf16>
    %cst_66 = arith.constant dense<0.000000e+00> : vector<8x128xf32>
    %107 = tpu.matmul %104, %106, %cst_66 {dimension_numbers = #tpu.dot_dimension_numbers<[1], [0], [0], [1], [0, 0, 1, 1], [], []>} : vector<8x128xbf16>, vector<128x128xbf16>, vector<8x128xf32> -> vector<8x128xf32>
    %c4_i32_67 = arith.constant 4 : i32
    %c0_i32_68 = arith.constant 0 : i32
    %c0_i32_69 = arith.constant 0 : i32
    %108 = tpu.memref_slice %arg1[%c4_i32_67, %c0_i32_68, %c0_i32_69] : memref<6x128x128xbf16, #tpu.memory_space<vmem>> -> memref<1x128x128xbf16, #tpu.memory_space<vmem>>
    %109 = tpu.memref_squeeze %108 : memref<1x128x128xbf16, #tpu.memory_space<vmem>> -> memref<128x128xbf16, #tpu.memory_space<vmem>>
    %c40 = arith.constant 40 : index
    %c0_70 = arith.constant 0 : index
    %110 = vector.load %109[%c40, %c0_70] : memref<128x128xbf16, #tpu.memory_space<vmem>>, vector<8x128xbf16>
    %111 = arith.extf %110 : vector<8x128xbf16> to vector<8x128xf32>
    %c5_i32_71 = arith.constant 5 : i32
    %c0_i32_72 = arith.constant 0 : i32
    %c0_i32_73 = arith.constant 0 : i32
    %112 = tpu.memref_slice %arg1[%c5_i32_71, %c0_i32_72, %c0_i32_73] : memref<6x128x128xbf16, #tpu.memory_space<vmem>> -> memref<1x128x128xbf16, #tpu.memory_space<vmem>>
    %113 = tpu.memref_squeeze %112 : memref<1x128x128xbf16, #tpu.memory_space<vmem>> -> memref<128x128xbf16, #tpu.memory_space<vmem>>
    %c40_74 = arith.constant 40 : index
    %c0_75 = arith.constant 0 : index
    %114 = vector.load %113[%c40_74, %c0_75] : memref<128x128xbf16, #tpu.memory_space<vmem>>, vector<8x128xbf16>
    %115 = arith.extf %114 : vector<8x128xbf16> to vector<8x128xf32>
    %116 = arith.addf %111, %115 : vector<8x128xf32>
    %117 = arith.addf %107, %116 : vector<8x128xf32>
    %cst_76 = arith.constant 0.000000e+00 : f32
    %118 = vector.broadcast %cst_76 : f32 to vector<8x128xf32>
    %119 = arith.maximumf %117, %118 : vector<8x128xf32>
    %c4_i32_77 = arith.constant 4 : i32
    %c0_i32_78 = arith.constant 0 : i32
    %c0_i32_79 = arith.constant 0 : i32
    %120 = tpu.memref_slice %arg1[%c4_i32_77, %c0_i32_78, %c0_i32_79] : memref<6x128x128xbf16, #tpu.memory_space<vmem>> -> memref<1x128x128xbf16, #tpu.memory_space<vmem>>
    %121 = tpu.memref_squeeze %120 : memref<1x128x128xbf16, #tpu.memory_space<vmem>> -> memref<128x128xbf16, #tpu.memory_space<vmem>>
    %c48 = arith.constant 48 : index
    %c0_80 = arith.constant 0 : index
    %122 = vector.load %121[%c48, %c0_80] : memref<128x128xbf16, #tpu.memory_space<vmem>>, vector<8x128xbf16>
    %123 = arith.extf %122 : vector<8x128xbf16> to vector<8x128xf32>
    %c5_i32_81 = arith.constant 5 : i32
    %c0_i32_82 = arith.constant 0 : i32
    %c0_i32_83 = arith.constant 0 : i32
    %124 = tpu.memref_slice %arg1[%c5_i32_81, %c0_i32_82, %c0_i32_83] : memref<6x128x128xbf16, #tpu.memory_space<vmem>> -> memref<1x128x128xbf16, #tpu.memory_space<vmem>>
    %125 = tpu.memref_squeeze %124 : memref<1x128x128xbf16, #tpu.memory_space<vmem>> -> memref<128x128xbf16, #tpu.memory_space<vmem>>
    %c48_84 = arith.constant 48 : index
    %c0_85 = arith.constant 0 : index
    %126 = vector.load %125[%c48_84, %c0_85] : memref<128x128xbf16, #tpu.memory_space<vmem>>, vector<8x128xbf16>
    %127 = arith.extf %126 : vector<8x128xbf16> to vector<8x128xf32>
    %128 = arith.addf %123, %127 : vector<8x128xf32>
    %c4_i32_86 = arith.constant 4 : i32
    %c0_i32_87 = arith.constant 0 : i32
    %c0_i32_88 = arith.constant 0 : i32
    %129 = tpu.memref_slice %arg1[%c4_i32_86, %c0_i32_87, %c0_i32_88] : memref<6x128x128xbf16, #tpu.memory_space<vmem>> -> memref<1x128x128xbf16, #tpu.memory_space<vmem>>
    %130 = tpu.memref_squeeze %129 : memref<1x128x128xbf16, #tpu.memory_space<vmem>> -> memref<128x128xbf16, #tpu.memory_space<vmem>>
    %c56 = arith.constant 56 : index
    %c0_89 = arith.constant 0 : index
    %131 = vector.load %130[%c56, %c0_89] : memref<128x128xbf16, #tpu.memory_space<vmem>>, vector<8x128xbf16>
    %132 = arith.extf %131 : vector<8x128xbf16> to vector<8x128xf32>
    %c5_i32_90 = arith.constant 5 : i32
    %c0_i32_91 = arith.constant 0 : i32
    %c0_i32_92 = arith.constant 0 : i32
    %133 = tpu.memref_slice %arg1[%c5_i32_90, %c0_i32_91, %c0_i32_92] : memref<6x128x128xbf16, #tpu.memory_space<vmem>> -> memref<1x128x128xbf16, #tpu.memory_space<vmem>>
    %134 = tpu.memref_squeeze %133 : memref<1x128x128xbf16, #tpu.memory_space<vmem>> -> memref<128x128xbf16, #tpu.memory_space<vmem>>
    %c56_93 = arith.constant 56 : index
    %c0_94 = arith.constant 0 : index
    %135 = vector.load %134[%c56_93, %c0_94] : memref<128x128xbf16, #tpu.memory_space<vmem>>, vector<8x128xbf16>
    %136 = arith.extf %135 : vector<8x128xbf16> to vector<8x128xf32>
    %137 = arith.addf %132, %136 : vector<8x128xf32>
    %cst_95 = arith.constant dense<0.000000e+00> : vector<128xf32>
    %138 = vector.multi_reduction <add>, %119, %cst_95 [0] : vector<8x128xf32> to vector<128xf32>
    %139 = vector.shape_cast %138 : vector<128xf32> to vector<1x128xf32>
    %cst_96 = arith.constant 8.000000e+00 : f32
    %140 = vector.broadcast %cst_96 : f32 to vector<1x128xf32>
    %141 = arith.divf %139, %140 : vector<1x128xf32>
    %142 = arith.mulf %119, %119 : vector<8x128xf32>
    %cst_97 = arith.constant dense<0.000000e+00> : vector<128xf32>
    %143 = vector.multi_reduction <add>, %142, %cst_97 [0] : vector<8x128xf32> to vector<128xf32>
    %144 = vector.shape_cast %143 : vector<128xf32> to vector<1x128xf32>
    %cst_98 = arith.constant 8.000000e+00 : f32
    %145 = vector.broadcast %cst_98 : f32 to vector<1x128xf32>
    %146 = arith.divf %144, %145 : vector<1x128xf32>
    %147 = arith.mulf %141, %141 : vector<1x128xf32>
    %148 = arith.subf %146, %147 : vector<1x128xf32>
    %cst_99 = arith.constant 0.000000e+00 : f32
    %149 = vector.broadcast %cst_99 : f32 to vector<1x128xf32>
    %150 = arith.maximumf %148, %149 : vector<1x128xf32>
    %cst_100 = arith.constant 9.99999974E-6 : f32
    %151 = vector.broadcast %cst_100 : f32 to vector<1x128xf32>
    %152 = arith.addf %150, %151 : vector<1x128xf32>
    %153 = math.rsqrt %152 : vector<1x128xf32>
    %154 = vector.broadcast %153 : vector<1x128xf32> to vector<8x128xf32>
    %155 = arith.mulf %128, %154 : vector<8x128xf32>
    %156 = vector.broadcast %141 : vector<1x128xf32> to vector<8x128xf32>
    %157 = arith.mulf %156, %155 : vector<8x128xf32>
    %158 = arith.subf %137, %157 : vector<8x128xf32>
    %159 = arith.mulf %119, %155 : vector<8x128xf32>
    %160 = arith.addf %159, %158 : vector<8x128xf32>
    %161 = arith.truncf %160 : vector<8x128xf32> to vector<8x128xbf16>
    %c3 = arith.constant 3 : index
    %c0_101 = arith.constant 0 : index
    %c0_102 = arith.constant 0 : index
    %162 = vector.load %arg1[%c3, %c0_101, %c0_102] : memref<6x128x128xbf16, #tpu.memory_space<vmem>>, vector<1x128x128xbf16>
    %163 = vector.shape_cast %162 : vector<1x128x128xbf16> to vector<128x128xbf16>
    %cst_103 = arith.constant dense<0.000000e+00> : vector<8x128xf32>
    %164 = tpu.matmul %161, %163, %cst_103 {dimension_numbers = #tpu.dot_dimension_numbers<[1], [0], [0], [1], [0, 0, 1, 1], [], []>} : vector<8x128xbf16>, vector<128x128xbf16>, vector<8x128xf32> -> vector<8x128xf32>
    %c4_i32_104 = arith.constant 4 : i32
    %c0_i32_105 = arith.constant 0 : i32
    %c0_i32_106 = arith.constant 0 : i32
    %165 = tpu.memref_slice %arg1[%c4_i32_104, %c0_i32_105, %c0_i32_106] : memref<6x128x128xbf16, #tpu.memory_space<vmem>> -> memref<1x128x128xbf16, #tpu.memory_space<vmem>>
    %166 = tpu.memref_squeeze %165 : memref<1x128x128xbf16, #tpu.memory_space<vmem>> -> memref<128x128xbf16, #tpu.memory_space<vmem>>
    %c64 = arith.constant 64 : index
    %c0_107 = arith.constant 0 : index
    %167 = vector.load %166[%c64, %c0_107] : memref<128x128xbf16, #tpu.memory_space<vmem>>, vector<8x128xbf16>
    %168 = arith.extf %167 : vector<8x128xbf16> to vector<8x128xf32>
    %c5_i32_108 = arith.constant 5 : i32
    %c0_i32_109 = arith.constant 0 : i32
    %c0_i32_110 = arith.constant 0 : i32
    %169 = tpu.memref_slice %arg1[%c5_i32_108, %c0_i32_109, %c0_i32_110] : memref<6x128x128xbf16, #tpu.memory_space<vmem>> -> memref<1x128x128xbf16, #tpu.memory_space<vmem>>
    %170 = tpu.memref_squeeze %169 : memref<1x128x128xbf16, #tpu.memory_space<vmem>> -> memref<128x128xbf16, #tpu.memory_space<vmem>>
    %c64_111 = arith.constant 64 : index
    %c0_112 = arith.constant 0 : index
    %171 = vector.load %170[%c64_111, %c0_112] : memref<128x128xbf16, #tpu.memory_space<vmem>>, vector<8x128xbf16>
    %172 = arith.extf %171 : vector<8x128xbf16> to vector<8x128xf32>
    %173 = arith.addf %168, %172 : vector<8x128xf32>
    %174 = arith.addf %164, %173 : vector<8x128xf32>
    %175 = arith.negf %174 : vector<8x128xf32>
    %176 = math.exp %175 : vector<8x128xf32>
    %cst_113 = arith.constant 1.000000e+00 : f32
    %177 = vector.broadcast %cst_113 : f32 to vector<8x128xf32>
    %178 = arith.addf %177, %176 : vector<8x128xf32>
    %179 = arith.divf %177, %178 : vector<8x128xf32>
    %c0_114 = arith.constant 0 : index
    %c0_115 = arith.constant 0 : index
    %180 = vector.load %arg2[%c0_114, %c0_115] : memref<8x128xf32, #tpu.memory_space<vmem>>, vector<8x128xf32>
    tpu.vector_store %arg2[%c0_114, %c0_115], %179 {strides = array<i32>} : memref<8x128xf32, #tpu.memory_space<vmem>>, vector<8x128xf32>,
    return
  }
}

</mosaic_0001>

<llo_original>
// kernel: mainmodel_forward.1
$region0: #{mainmodel_forward.1}
  #allocation0 [shape = 'u32[]', space=smem, size = 0x4, offset = 0x4, fixed_abs, tag = 'smem constant byte address 0x4 - core index']
  #allocation1 [shape = 'u32[144,128]{1,0:T(1,128)}', space=vmem, size = 0x12000, scoped, tag = 'internal scratch']
  %s0 = inlined_call_operand.vmem [shape: bf16[8,128], index: 0, kind: input, shape index: {}]
  %s1 = inlined_call_operand.hbm [shape: bf16[6,128,128], index: 1, kind: input, shape index: {}]
  %s2 = inlined_call_operand.hbm [shape: f32[8,128], index: 2, kind: output, shape index: {}]
  %s3 = sld [smem:[#allocation0]]
  $region22: #{mainmodel_forward.1} parent=0
    _
  %s5 = ssub.s32 1, %s3
  %s6 = scalar_select 0, %s5, %s3
  $region1: #{mainmodel_forward.1} parent=0
    #allocation2 [shape = 'u8[196608]{0}', space=vmem, size = 0x30000, scoped, tag = 'input window, operand 1, single buffered']
    #allocation3 [shape = 's32[1]{0}', space=sflag, size = 0x4, scoped, tag = 'scoped memory for mainmodel_forward.1']
    #allocation4 [shape = 's32[1]{0}', space=sflag, size = 0x4, scoped, tag = 'scoped memory for mainmodel_forward.1']
    #allocation5 [shape = 'u8[4096]{0}', space=vmem, size = 0x1000, scoped, tag = 'output window, operand 0, single buffered']
    %7 = vsyncpa [#allocation3], 0
    %8 = vsyncpa [#allocation4], 0
    // Predicated region
    $region2: #{mainmodel_forward.1} parent=1 // pred_check
      _
    $region3: #{mainmodel_forward.1} parent=1 // pred_check_branch
      %10 = sbr.rel (0) target = $region5
    $region4: #{mainmodel_forward.1} parent=1 // pred_region
      _
    $region5: #{mainmodel_forward.1} parent=1 // pred_fallthru
      _
    // Predicated region
    $region6: #{mainmodel_forward.1} parent=1 // pred_check
      _
    $region7: #{mainmodel_forward.1} parent=1 // pred_check_branch
      %12 = sbr.rel (0) target = $region9
    $region8: #{mainmodel_forward.1} parent=1 // pred_region
      %s14 = ssub.s32 6144, 6144
      %15 = vsyncadd [#allocation3], %s14
      %s16 = sshll.u32 [#allocation2], 4
      %s17 = int_to_ptr.vmem [resolvable:$true] %s16
      %22 = dma.hbm_to_vmem [thread:$0]  %s1, 6144, %s17, [#allocation3], 64, 64, 4
    $region9: #{mainmodel_forward.1} parent=1 // pred_fallthru
      _
    // Predicated region
    $region10: #{mainmodel_forward.1} parent=1 // pred_check
      _
    $region11: #{mainmodel_forward.1} parent=1 // pred_check_branch
      %24 = sbr.rel (0) target = $region13
    $region12: #{mainmodel_forward.1} parent=1 // pred_region
      %25 = dma.done [#allocation3], 6144
    $region13: #{mainmodel_forward.1} parent=1 // pred_fallthru
      _
    %v27 = vld [vmem:[%s0] sm:$0xf]
    %v28 = vld [vmem:[#allocation2] sm:$0xf]
    %v29 = vld [vmem:[#allocation2 + $0x4] sm:$0xf]
    %v30 = vld [vmem:[#allocation2 + $0x8] sm:$0xf]
    %v31 = vld [vmem:[#allocation2 + $0xc] sm:$0xf]
    %v32 = vld [vmem:[#allocation2 + $0x10] sm:$0xf]
    %v33 = vld [vmem:[#allocation2 + $0x14] sm:$0xf]
    %v34 = vld [vmem:[#allocation2 + $0x18] sm:$0xf]
    %v35 = vld [vmem:[#allocation2 + $0x1c] sm:$0xf]
    %v36 = vld [vmem:[#allocation2 + $0x20] sm:$0xf]
    %v37 = vld [vmem:[#allocation2 + $0x24] sm:$0xf]
    %v38 = vld [vmem:[#allocation2 + $0x28] sm:$0xf]
    %v39 = vld [vmem:[#allocation2 + $0x2c] sm:$0xf]
    %v40 = vld [vmem:[#allocation2 + $0x30] sm:$0xf]
    %v41 = vld [vmem:[#allocation2 + $0x34] sm:$0xf]
    %v42 = vld [vmem:[#allocation2 + $0x38] sm:$0xf]
    %v43 = vld [vmem:[#allocation2 + $0x3c] sm:$0xf]
    %v60 = vunpack.c.l.b16 %v28
    %v61 = vunpack.c.l.b16 %v29
    %v62 = vunpack.c.l.b16 %v30
    %v63 = vunpack.c.l.b16 %v31
    %v64 = vunpack.c.l.b16 %v32
    %v65 = vunpack.c.l.b16 %v33
    %v66 = vunpack.c.l.b16 %v34
    %v67 = vunpack.c.l.b16 %v35
    %v68 = vunpack.c.l.b16 %v36
    %v69 = vunpack.c.l.b16 %v37
    %v70 = vunpack.c.l.b16 %v38
    %v71 = vunpack.c.l.b16 %v39
    %v72 = vunpack.c.l.b16 %v40
    %v73 = vunpack.c.l.b16 %v41
    %v74 = vunpack.c.l.b16 %v42
    %v75 = vunpack.c.l.b16 %v43
    %v76 = vpack.c.b16 %v61, %v60
    %v77 = vpack.c.b16 %v63, %v62
    %v78 = vpack.c.b16 %v65, %v64
    %v79 = vpack.c.b16 %v67, %v66
    %v80 = vpack.c.b16 %v69, %v68
    %v81 = vpack.c.b16 %v71, %v70
    %v82 = vpack.c.b16 %v73, %v72
    %v83 = vpack.c.b16 %v75, %v74
    %92 = vmatprep.subr.bf16.mxu0 0
    %93 = vmatpush1.bf16.msra.mxu0 %v83
    %94 = vmatprep.subr.bf16.mxu0 0
    %95 = vmatpush1.bf16.msra.mxu0 %v82
    %96 = vmatprep.subr.bf16.mxu0 0
    %97 = vmatpush1.bf16.msra.mxu0 %v81
    %98 = vmatprep.subr.bf16.mxu0 0
    %99 = vmatpush1.bf16.msra.mxu0 %v80
    %100 = vmatprep.subr.bf16.mxu0 0
    %101 = vmatpush1.bf16.msra.mxu0 %v79
    %102 = vmatprep.subr.bf16.mxu0 0
    %103 = vmatpush1.bf16.msra.mxu0 %v78
    %104 = vmatprep.subr.bf16.mxu0 0
    %105 = vmatpush1.bf16.msra.mxu0 %v77
    %106 = vmatprep.subr.bf16.mxu0 0
    %107 = vmatpush1.bf16.msra.mxu0 %v76
    %108 = vmatprep.subr.bf16.mxu0 0
    %109 = vmatpush2.bf16.msra.mxu0 0
    %110 = vmatprep.subr.bf16.mxu0 0
    %111 = vmatpush2.bf16.msra.mxu0 0
    %112 = vmatprep.subr.bf16.mxu0 0
    %113 = vmatpush2.bf16.msra.mxu0 0
    %114 = vmatprep.subr.bf16.mxu0 0
    %115 = vmatpush2.bf16.msra.mxu0 0
    %116 = vmatprep.subr.bf16.mxu0 0
    %117 = vmatpush2.bf16.msra.mxu0 0
    %118 = vmatprep.subr.bf16.mxu0 0
    %119 = vmatpush2.bf16.msra.mxu0 0
    %120 = vmatprep.subr.bf16.mxu0 0
    %121 = vmatpush2.bf16.msra.mxu0 0
    %122 = vmatprep.subr.bf16.mxu0 0
    %123 = vmatpush2.bf16.msra.mxu0 0
    %124 = vmatprep.mubr.bf16.mxu0 0
    %125 = vmatmul.mubr.bf16.gmra.mxu0 %v27
    %v126 = vpop.f32.mrf.mxu0
    %v127 = vadd.f32 0.0, %v126
    %v128 = vpop.f32.mrf.mxu0
    %v129 = vpop.f32.mrf.mxu0
    %v130 = vpop.f32.mrf.mxu0
    %131 = vdwg.mxu0
    %v132 = vmax.f32 %v127, 0.0
    %s133 = scalar_lea.vmem [#allocation2], 256
    %v134 = vld [vmem:[%s133] sm:$0xf]
    %v135 = vunpack.c.l.bf16 %v134
    %s136 = scalar_lea.vmem [#allocation2], 320
    %v137 = vld [vmem:[%s136] sm:$0xf]
    %v138 = vunpack.c.l.bf16 %v137
    %v139 = vadd.f32 %v135, %v138
    %v140 = vld [vmem:[%s133 + $0x4] sm:$0xf]
    %v141 = vunpack.c.l.bf16 %v140
    %v142 = vld [vmem:[%s136 + $0x4] sm:$0xf]
    %v143 = vunpack.c.l.bf16 %v142
    %v144 = vadd.f32 %v141, %v143
    %v145 = vrot.slane %v132, 4
    %v146 = vadd.f32 %v132, %v145
    %v147 = vrot.slane %v146, 2
    %v148 = vadd.f32 %v146, %v147
    %v149 = vrot.slane %v148, 1
    %v150 = vadd.f32 %v148, %v149
    %v151 = vrcp.pop 8.0
    %v152 = vmul.f32 %v150, %v151
    %v153 = vmul.f32 %v132, %v132
    %v154 = vrot.slane %v153, 4
    %v155 = vadd.f32 %v153, %v154
    %v156 = vrot.slane %v155, 2
    %v157 = vadd.f32 %v155, %v156
    %v158 = vrot.slane %v157, 1
    %v159 = vadd.f32 %v157, %v158
    %v160 = vmul.f32 %v159, %v151
    %v161 = vmul.f32 %v152, %v152
    %v162 = vsub.f32 %v160, %v161
    %v163 = vmax.f32 %v162, 0.0
    %v164 = vadd.f32 %v163, 1e-05
    %v165 = vrsqrt.pop %v164
    %v166 = vmul.f32 %v139, %v165
    %v167 = vmul.f32 %v152, %v166
    %v168 = vsub.f32 %v144, %v167
    %v169 = vmul.f32 %v132, %v166
    %v170 = vadd.f32 %v169, %v168
    %v171 = vpack.c.bf16 %v170, %v170
    %s172 = scalar_lea.vmem [#allocation2], 64
    %v173 = vld [vmem:[%s172] sm:$0xf]
    %v174 = vld [vmem:[%s172 + $0x4] sm:$0xf]
    %v175 = vld [vmem:[%s172 + $0x8] sm:$0xf]
    %v176 = vld [vmem:[%s172 + $0xc] sm:$0xf]
    %v177 = vld [vmem:[%s172 + $0x10] sm:$0xf]
    %v178 = vld [vmem:[%s172 + $0x14] sm:$0xf]
    %v179 = vld [vmem:[%s172 + $0x18] sm:$0xf]
    %v180 = vld [vmem:[%s172 + $0x1c] sm:$0xf]
    %v181 = vld [vmem:[%s172 + $0x20] sm:$0xf]
    %v182 = vld [vmem:[%s172 + $0x24] sm:$0xf]
    %v183 = vld [vmem:[%s172 + $0x28] sm:$0xf]
    %v184 = vld [vmem:[%s172 + $0x2c] sm:$0xf]
    %v185 = vld [vmem:[%s172 + $0x30] sm:$0xf]
    %v186 = vld [vmem:[%s172 + $0x34] sm:$0xf]
    %v187 = vld [vmem:[%s172 + $0x38] sm:$0xf]
    %v188 = vld [vmem:[%s172 + $0x3c] sm:$0xf]
    %v189 = vld [vmem:[%s133 + $0x8] sm:$0xf]
    %v190 = vunpack.c.l.bf16 %v189
    %v191 = vld [vmem:[%s136 + $0x8] sm:$0xf]
    %v192 = vunpack.c.l.bf16 %v191
    %v193 = vadd.f32 %v190, %v192
    %v210 = vunpack.c.l.b16 %v173
    %v211 = vunpack.c.l.b16 %v174
    %v212 = vunpack.c.l.b16 %v175
    %v213 = vunpack.c.l.b16 %v176
    %v214 = vunpack.c.l.b16 %v177
    %v215 = vunpack.c.l.b16 %v178
    %v216 = vunpack.c.l.b16 %v179
    %v217 = vunpack.c.l.b16 %v180
    %v218 = vunpack.c.l.b16 %v181
    %v219 = vunpack.c.l.b16 %v182
    %v220 = vunpack.c.l.b16 %v183
    %v221 = vunpack.c.l.b16 %v184
    %v222 = vunpack.c.l.b16 %v185
    %v223 = vunpack.c.l.b16 %v186
    %v224 = vunpack.c.l.b16 %v187
    %v225 = vunpack.c.l.b16 %v188
    %v226 = vpack.c.b16 %v211, %v210
    %v227 = vpack.c.b16 %v213, %v212
    %v228 = vpack.c.b16 %v215, %v214
    %v229 = vpack.c.b16 %v217, %v216
    %v230 = vpack.c.b16 %v219, %v218
    %v231 = vpack.c.b16 %v221, %v220
    %v232 = vpack.c.b16 %v223, %v222
    %v233 = vpack.c.b16 %v225, %v224
    %242 = vmatprep.subr.bf16.mxu0 0
    %243 = vmatpush1.bf16.msra.mxu0 %v233
    %244 = vmatprep.subr.bf16.mxu0 0
    %245 = vmatpush1.bf16.msra.mxu0 %v232
    %246 = vmatprep.subr.bf16.mxu0 0
    %247 = vmatpush1.bf16.msra.mxu0 %v231
    %248 = vmatprep.subr.bf16.mxu0 0
    %249 = vmatpush1.bf16.msra.mxu0 %v230
    %250 = vmatprep.subr.bf16.mxu0 0
    %251 = vmatpush1.bf16.msra.mxu0 %v229
    %252 = vmatprep.subr.bf16.mxu0 0
    %253 = vmatpush1.bf16.msra.mxu0 %v228
    %254 = vmatprep.subr.bf16.mxu0 0
    %255 = vmatpush1.bf16.msra.mxu0 %v227
    %256 = vmatprep.subr.bf16.mxu0 0
    %257 = vmatpush1.bf16.msra.mxu0 %v226
    %258 = vmatprep.subr.bf16.mxu0 0
    %259 = vmatpush2.bf16.msra.mxu0 0
    %260 = vmatprep.subr.bf16.mxu0 0
    %261 = vmatpush2.bf16.msra.mxu0 0
    %262 = vmatprep.subr.bf16.mxu0 0
    %263 = vmatpush2.bf16.msra.mxu0 0
    %264 = vmatprep.subr.bf16.mxu0 0
    %265 = vmatpush2.bf16.msra.mxu0 0
    %266 = vmatprep.subr.bf16.mxu0 0
    %267 = vmatpush2.bf16.msra.mxu0 0
    %268 = vmatprep.subr.bf16.mxu0 0
    %269 = vmatpush2.bf16.msra.mxu0 0
    %270 = vmatprep.subr.bf16.mxu0 0
    %271 = vmatpush2.bf16.msra.mxu0 0
    %272 = vmatprep.subr.bf16.mxu0 0
    %273 = vmatpush2.bf16.msra.mxu0 0
    %274 = vmatprep.mubr.bf16.mxu0 0
    %275 = vmatmul.mubr.bf16.gmra.mxu0 %v171
    %v276 = vpop.f32.mrf.mxu0
    %v277 = vadd.f32 %v193, %v276
    %v278 = vpop.f32.mrf.mxu0
    %v279 = vpop.f32.mrf.mxu0
    %v280 = vpop.f32.mrf.mxu0
    %281 = vdwg.mxu0
    %v282 = vmax.f32 %v277, 0.0
    %v283 = vld [vmem:[%s133 + $0xc] sm:$0xf]
    %v284 = vunpack.c.l.bf16 %v283
    %v285 = vld [vmem:[%s136 + $0xc] sm:$0xf]
    %v286 = vunpack.c.l.bf16 %v285
    %v287 = vadd.f32 %v284, %v286
    %v288 = vld [vmem:[%s133 + $0x10] sm:$0xf]
    %v289 = vunpack.c.l.bf16 %v288
    %v290 = vld [vmem:[%s136 + $0x10] sm:$0xf]
    %v291 = vunpack.c.l.bf16 %v290
    %v292 = vadd.f32 %v289, %v291
    %v293 = vrot.slane %v282, 4
    %v294 = vadd.f32 %v282, %v293
    %v295 = vrot.slane %v294, 2
    %v296 = vadd.f32 %v294, %v295
    %v297 = vrot.slane %v296, 1
    %v298 = vadd.f32 %v296, %v297
    %v299 = vmul.f32 %v298, %v151
    %v300 = vmul.f32 %v282, %v282
    %v301 = vrot.slane %v300, 4
    %v302 = vadd.f32 %v300, %v301
    %v303 = vrot.slane %v302, 2
    %v304 = vadd.f32 %v302, %v303
    %v305 = vrot.slane %v304, 1
    %v306 = vadd.f32 %v304, %v305
    %v307 = vmul.f32 %v306, %v151
    %v308 = vmul.f32 %v299, %v299
    %v309 = vsub.f32 %v307, %v308
    %v310 = vmax.f32 %v309, 0.0
    %v311 = vadd.f32 %v310, 1e-05
    %v312 = vrsqrt.pop %v311
    %v313 = vmul.f32 %v287, %v312
    %v314 = vmul.f32 %v299, %v313
    %v315 = vsub.f32 %v292, %v314
    %v316 = vmul.f32 %v282, %v313
    %v317 = vadd.f32 %v316, %v315
    %v318 = vpack.c.bf16 %v317, %v317
    %s319 = scalar_lea.vmem [#allocation2], 128
    %v320 = vld [vmem:[%s319] sm:$0xf]
    %v321 = vld [vmem:[%s319 + $0x4] sm:$0xf]
    %v322 = vld [vmem:[%s319 + $0x8] sm:$0xf]
    %v323 = vld [vmem:[%s319 + $0xc] sm:$0xf]
    %v324 = vld [vmem:[%s319 + $0x10] sm:$0xf]
    %v325 = vld [vmem:[%s319 + $0x14] sm:$0xf]
    %v326 = vld [vmem:[%s319 + $0x18] sm:$0xf]
    %v327 = vld [vmem:[%s319 + $0x1c] sm:$0xf]
    %v328 = vld [vmem:[%s319 + $0x20] sm:$0xf]
    %v329 = vld [vmem:[%s319 + $0x24] sm:$0xf]
    %v330 = vld [vmem:[%s319 + $0x28] sm:$0xf]
    %v331 = vld [vmem:[%s319 + $0x2c] sm:$0xf]
    %v332 = vld [vmem:[%s319 + $0x30] sm:$0xf]
    %v333 = vld [vmem:[%s319 + $0x34] sm:$0xf]
    %v334 = vld [vmem:[%s319 + $0x38] sm:$0xf]
    %v335 = vld [vmem:[%s319 + $0x3c] sm:$0xf]
    %v336 = vld [vmem:[%s133 + $0x14] sm:$0xf]
    %v337 = vunpack.c.l.bf16 %v336
    %v338 = vld [vmem:[%s136 + $0x14] sm:$0xf]
    %v339 = vunpack.c.l.bf16 %v338
    %v340 = vadd.f32 %v337, %v339
    %v357 = vunpack.c.l.b16 %v320
    %v358 = vunpack.c.l.b16 %v321
    %v359 = vunpack.c.l.b16 %v322
    %v360 = vunpack.c.l.b16 %v323
    %v361 = vunpack.c.l.b16 %v324
    %v362 = vunpack.c.l.b16 %v325
    %v363 = vunpack.c.l.b16 %v326
    %v364 = vunpack.c.l.b16 %v327
    %v365 = vunpack.c.l.b16 %v328
    %v366 = vunpack.c.l.b16 %v329
    %v367 = vunpack.c.l.b16 %v330
    %v368 = vunpack.c.l.b16 %v331
    %v369 = vunpack.c.l.b16 %v332
    %v370 = vunpack.c.l.b16 %v333
    %v371 = vunpack.c.l.b16 %v334
    %v372 = vunpack.c.l.b16 %v335
    %v373 = vpack.c.b16 %v358, %v357
    %v374 = vpack.c.b16 %v360, %v359
    %v375 = vpack.c.b16 %v362, %v361
    %v376 = vpack.c.b16 %v364, %v363
    %v377 = vpack.c.b16 %v366, %v365
    %v378 = vpack.c.b16 %v368, %v367
    %v379 = vpack.c.b16 %v370, %v369
    %v380 = vpack.c.b16 %v372, %v371
    %389 = vmatprep.subr.bf16.mxu0 0
    %390 = vmatpush1.bf16.msra.mxu0 %v380
    %391 = vmatprep.subr.bf16.mxu0 0
    %392 = vmatpush1.bf16.msra.mxu0 %v379
    %393 = vmatprep.subr.bf16.mxu0 0
    %394 = vmatpush1.bf16.msra.mxu0 %v378
    %395 = vmatprep.subr.bf16.mxu0 0
    %396 = vmatpush1.bf16.msra.mxu0 %v377
    %397 = vmatprep.subr.bf16.mxu0 0
    %398 = vmatpush1.bf16.msra.mxu0 %v376
    %399 = vmatprep.subr.bf16.mxu0 0
    %400 = vmatpush1.bf16.msra.mxu0 %v375
    %401 = vmatprep.subr.bf16.mxu0 0
    %402 = vmatpush1.bf16.msra.mxu0 %v374
    %403 = vmatprep.subr.bf16.mxu0 0
    %404 = vmatpush1.bf16.msra.mxu0 %v373
    %405 = vmatprep.subr.bf16.mxu0 0
    %406 = vmatpush2.bf16.msra.mxu0 0
    %407 = vmatprep.subr.bf16.mxu0 0
    %408 = vmatpush2.bf16.msra.mxu0 0
    %409 = vmatprep.subr.bf16.mxu0 0
    %410 = vmatpush2.bf16.msra.mxu0 0
    %411 = vmatprep.subr.bf16.mxu0 0
    %412 = vmatpush2.bf16.msra.mxu0 0
    %413 = vmatprep.subr.bf16.mxu0 0
    %414 = vmatpush2.bf16.msra.mxu0 0
    %415 = vmatprep.subr.bf16.mxu0 0
    %416 = vmatpush2.bf16.msra.mxu0 0
    %417 = vmatprep.subr.bf16.mxu0 0
    %418 = vmatpush2.bf16.msra.mxu0 0
    %419 = vmatprep.subr.bf16.mxu0 0
    %420 = vmatpush2.bf16.msra.mxu0 0
    %421 = vmatprep.mubr.bf16.mxu0 0
    %422 = vmatmul.mubr.bf16.gmra.mxu0 %v318
    %v423 = vpop.f32.mrf.mxu0
    %v424 = vadd.f32 %v340, %v423
    %v425 = vpop.f32.mrf.mxu0
    %v426 = vpop.f32.mrf.mxu0
    %v427 = vpop.f32.mrf.mxu0
    %428 = vdwg.mxu0
    %v429 = vmax.f32 %v424, 0.0
    %v430 = vld [vmem:[%s133 + $0x18] sm:$0xf]
    %v431 = vunpack.c.l.bf16 %v430
    %v432 = vld [vmem:[%s136 + $0x18] sm:$0xf]
    %v433 = vunpack.c.l.bf16 %v432
    %v434 = vadd.f32 %v431, %v433
    %v435 = vld [vmem:[%s133 + $0x1c] sm:$0xf]
    %v436 = vunpack.c.l.bf16 %v435
    %v437 = vld [vmem:[%s136 + $0x1c] sm:$0xf]
    %v438 = vunpack.c.l.bf16 %v437
    %v439 = vadd.f32 %v436, %v438
    %v440 = vrot.slane %v429, 4
    %v441 = vadd.f32 %v429, %v440
    %v442 = vrot.slane %v441, 2
    %v443 = vadd.f32 %v441, %v442
    %v444 = vrot.slane %v443, 1
    %v445 = vadd.f32 %v443, %v444
    %v446 = vmul.f32 %v445, %v151
    %v447 = vmul.f32 %v429, %v429
    %v448 = vrot.slane %v447, 4
    %v449 = vadd.f32 %v447, %v448
    %v450 = vrot.slane %v449, 2
    %v451 = vadd.f32 %v449, %v450
    %v452 = vrot.slane %v451, 1
    %v453 = vadd.f32 %v451, %v452
    %v454 = vmul.f32 %v453, %v151
    %v455 = vmul.f32 %v446, %v446
    %v456 = vsub.f32 %v454, %v455
    %v457 = vmax.f32 %v456, 0.0
    %v458 = vadd.f32 %v457, 1e-05
    %v459 = vrsqrt.pop %v458
    %v460 = vmul.f32 %v434, %v459
    %v461 = vmul.f32 %v446, %v460
    %v462 = vsub.f32 %v439, %v461
    %v463 = vmul.f32 %v429, %v460
    %v464 = vadd.f32 %v463, %v462
    %v465 = vpack.c.bf16 %v464, %v464
    %s466 = scalar_lea.vmem [#allocation2], 192
    %v467 = vld [vmem:[%s466] sm:$0xf]
    %v468 = vld [vmem:[%s466 + $0x4] sm:$0xf]
    %v469 = vld [vmem:[%s466 + $0x8] sm:$0xf]
    %v470 = vld [vmem:[%s466 + $0xc] sm:$0xf]
    %v471 = vld [vmem:[%s466 + $0x10] sm:$0xf]
    %v472 = vld [vmem:[%s466 + $0x14] sm:$0xf]
    %v473 = vld [vmem:[%s466 + $0x18] sm:$0xf]
    %v474 = vld [vmem:[%s466 + $0x1c] sm:$0xf]
    %v475 = vld [vmem:[%s466 + $0x20] sm:$0xf]
    %v476 = vld [vmem:[%s466 + $0x24] sm:$0xf]
    %v477 = vld [vmem:[%s466 + $0x28] sm:$0xf]
    %v478 = vld [vmem:[%s466 + $0x2c] sm:$0xf]
    %v479 = vld [vmem:[%s466 + $0x30] sm:$0xf]
    %v480 = vld [vmem:[%s466 + $0x34] sm:$0xf]
    %v481 = vld [vmem:[%s466 + $0x38] sm:$0xf]
    %v482 = vld [vmem:[%s466 + $0x3c] sm:$0xf]
    %v483 = vld [vmem:[%s133 + $0x20] sm:$0xf]
    %v484 = vunpack.c.l.bf16 %v483
    %v485 = vld [vmem:[%s136 + $0x20] sm:$0xf]
    %v486 = vunpack.c.l.bf16 %v485
    %v487 = vadd.f32 %v484, %v486
    %v504 = vunpack.c.l.b16 %v467
    %v505 = vunpack.c.l.b16 %v468
    %v506 = vunpack.c.l.b16 %v469
    %v507 = vunpack.c.l.b16 %v470
    %v508 = vunpack.c.l.b16 %v471
    %v509 = vunpack.c.l.b16 %v472
    %v510 = vunpack.c.l.b16 %v473
    %v511 = vunpack.c.l.b16 %v474
    %v512 = vunpack.c.l.b16 %v475
    %v513 = vunpack.c.l.b16 %v476
    %v514 = vunpack.c.l.b16 %v477
    %v515 = vunpack.c.l.b16 %v478
    %v516 = vunpack.c.l.b16 %v479
    %v517 = vunpack.c.l.b16 %v480
    %v518 = vunpack.c.l.b16 %v481
    %v519 = vunpack.c.l.b16 %v482
    %v520 = vpack.c.b16 %v505, %v504
    %v521 = vpack.c.b16 %v507, %v506
    %v522 = vpack.c.b16 %v509, %v508
    %v523 = vpack.c.b16 %v511, %v510
    %v524 = vpack.c.b16 %v513, %v512
    %v525 = vpack.c.b16 %v515, %v514
    %v526 = vpack.c.b16 %v517, %v516
    %v527 = vpack.c.b16 %v519, %v518
    %536 = vmatprep.subr.bf16.mxu0 0
    %537 = vmatpush1.bf16.msra.mxu0 %v527
    %538 = vmatprep.subr.bf16.mxu0 0
    %539 = vmatpush1.bf16.msra.mxu0 %v526
    %540 = vmatprep.subr.bf16.mxu0 0
    %541 = vmatpush1.bf16.msra.mxu0 %v525
    %542 = vmatprep.subr.bf16.mxu0 0
    %543 = vmatpush1.bf16.msra.mxu0 %v524
    %544 = vmatprep.subr.bf16.mxu0 0
    %545 = vmatpush1.bf16.msra.mxu0 %v523
    %546 = vmatprep.subr.bf16.mxu0 0
    %547 = vmatpush1.bf16.msra.mxu0 %v522
    %548 = vmatprep.subr.bf16.mxu0 0
    %549 = vmatpush1.bf16.msra.mxu0 %v521
    %550 = vmatprep.subr.bf16.mxu0 0
    %551 = vmatpush1.bf16.msra.mxu0 %v520
    %552 = vmatprep.subr.bf16.mxu0 0
    %553 = vmatpush2.bf16.msra.mxu0 0
    %554 = vmatprep.subr.bf16.mxu0 0
    %555 = vmatpush2.bf16.msra.mxu0 0
    %556 = vmatprep.subr.bf16.mxu0 0
    %557 = vmatpush2.bf16.msra.mxu0 0
    %558 = vmatprep.subr.bf16.mxu0 0
    %559 = vmatpush2.bf16.msra.mxu0 0
    %560 = vmatprep.subr.bf16.mxu0 0
    %561 = vmatpush2.bf16.msra.mxu0 0
    %562 = vmatprep.subr.bf16.mxu0 0
    %563 = vmatpush2.bf16.msra.mxu0 0
    %564 = vmatprep.subr.bf16.mxu0 0
    %565 = vmatpush2.bf16.msra.mxu0 0
    %566 = vmatprep.subr.bf16.mxu0 0
    %567 = vmatpush2.bf16.msra.mxu0 0
    %568 = vmatprep.mubr.bf16.mxu0 0
    %569 = vmatmul.mubr.bf16.gmra.mxu0 %v465
    %v570 = vpop.f32.mrf.mxu0
    %v571 = vadd.f32 %v487, %v570
    %v572 = vpop.f32.mrf.mxu0
    %v573 = vpop.f32.mrf.mxu0
    %v574 = vpop.f32.mrf.mxu0
    %575 = vdwg.mxu0
    %v576 = vxor.u32 %v571, 2147483648
    %v577 = vmul.f32 %v576, 1.442695
    %v578 = vpow.pop %v577
    %v579 = vadd.f32 %v578, 1.0
    %v580 = vrcp.pop %v579
    %v581 = vmul.f32 1.0, %v580
    %582 = vst [vmem:[#allocation5] sm:$0xff] %v581
    // Predicated region
    $region14: #{mainmodel_forward.1} parent=1 // pred_check
      _
    $region15: #{mainmodel_forward.1} parent=1 // pred_check_branch
      %584 = sbr.rel (0) target = $region17
    $region16: #{mainmodel_forward.1} parent=1 // pred_region
      %s586 = ssub.s32 128, 128
      %587 = vsyncadd [#allocation4], %s586
      %s589 = sshll.u32 [#allocation5], 4
      %s590 = int_to_ptr.vmem [resolvable:$true] %s589
      %592 = dma.vmem_to_hbm [thread:$0]  %s590, 128, %s2, [#allocation4]
    $region17: #{mainmodel_forward.1} parent=1 // pred_fallthru
      _
    // Predicated region
    $region18: #{mainmodel_forward.1} parent=1 // pred_check
      _
    $region19: #{mainmodel_forward.1} parent=1 // pred_check_branch
      %594 = sbr.rel (0) target = $region21
    $region20: #{mainmodel_forward.1} parent=1 // pred_region
      %595 = dma.done [#allocation4], 128
    $region21: #{mainmodel_forward.1} parent=1 // pred_fallthru
      _
    %596 = vsyncpa [#allocation3], 1
    %597 = vsyncpa [#allocation4], 1

</llo_original>
